<compile_context>
chip_gen: v6e
topology: v6e:2x2x1
jax: 0.10.0
libtpu: 0.0.40
codegen_flags: <defaults>
</compile_context>

<pallas_src>
import jax
import jax.numpy as jnp
from jax.experimental import pallas as pl
from jax.experimental.pallas import tpu as pltpu

LN_EPS = 1e-5


def _layernorm(x, gamma, beta):
    mu = jnp.mean(x, axis=-1, keepdims=True)
    var = jnp.mean((x - mu) ** 2, axis=-1, keepdims=True)
    return (x - mu) * jax.lax.rsqrt(var + LN_EPS) * gamma + beta


# ---------------------------------------------------------------------------
# Stage 1: fused QKV projection.  Q is pre-scaled (1/sqrt(hd) folded into wqkv).
# ---------------------------------------------------------------------------
def qkv_proj_kernel(x_ref, wqkv_ref, bqkv_ref, q_ref, k_ref, v_ref):
    E = q_ref.shape[-1]
    x_bf = x_ref[...].astype(jnp.bfloat16)                      # (TQ, E)
    qkv = jnp.dot(x_bf, wqkv_ref[...],
                  preferred_element_type=jnp.float32) + bqkv_ref[...]   # (TQ, 3E) f32
    q_ref[...] = qkv[:, 0:E].astype(jnp.bfloat16)
    k_ref[...] = qkv[:, E:2 * E].astype(jnp.bfloat16)
    v_ref[...] = qkv[:, 2 * E:3 * E].astype(jnp.bfloat16)


# ---------------------------------------------------------------------------
# Stage 2: head-batched attention + output projection + LN + MLP + LN.
# ---------------------------------------------------------------------------
def attn_ffn_kernel(x_ref, q_ref, k_ref, v_ref, mask_ref, wo_ref, bo_ref,
                    g_ref, be_ref, w1_ref, b1_ref, w2_ref, b2_ref, out_ref):
    x = x_ref[...]                                   # (TQ, E) f32 residual
    qh = q_ref[...]                                  # (nh, TQ, hd) bf16, pre-scaled
    kh = k_ref[...]                                  # (nh, S,  hd) bf16
    vh = v_ref[...]                                  # (nh, S,  hd) bf16

    bias = mask_ref[...] * jnp.float32(-1e9)         # (1, S) additive key-padding bias

    # scores / softmax (f32 elementwise, EUP reciprocal)
    s = jnp.einsum("hqd,hkd->hqk", qh, kh,
                   preferred_element_type=jnp.float32)           # (nh, TQ, S)
    s = s + bias
    s = s - jnp.max(s, axis=-1, keepdims=True)
    p = jnp.exp(s)
    p = p * pl.reciprocal(jnp.sum(p, axis=-1, keepdims=True), approx=True)

    # context + per-head output projection, summed over heads
    ctx = jnp.einsum("hqk,hkd->hqd", p.astype(jnp.bfloat16), vh,
                     preferred_element_type=jnp.float32)          # (nh, TQ, hd)
    proj = jnp.einsum("hqd,hde->hqe", ctx.astype(jnp.bfloat16), wo_ref[...],
                      preferred_element_type=jnp.float32)         # (nh, TQ, E)
    interacted = jnp.sum(proj, axis=0) + bo_ref[...]              # (TQ, E)

    g = g_ref[...]
    be = be_ref[...]
    inter = _layernorm(x + interacted, g, be)

    # MLP: Linear(E, 4E) -> ReLU -> Linear(4E, E)
    h1 = jnp.dot(inter.astype(jnp.bfloat16), w1_ref[...],
                 preferred_element_type=jnp.float32) + b1_ref[...]
    h1 = jnp.maximum(h1, 0.0)
    mlp = jnp.dot(h1.astype(jnp.bfloat16), w2_ref[...],
                  preferred_element_type=jnp.float32) + b2_ref[...]

    out_ref[...] = _layernorm(mlp + inter, g, be)


# ---------------------------------------------------------------------------
# Wrapper
# ---------------------------------------------------------------------------
def encoder_layer(embeddings, mask, params, num_heads, *, tq=None):
    # mimic embeddings.squeeze(1) / mask.squeeze(1)
    x = jnp.squeeze(embeddings, axis=1).astype(jnp.float32)      # (B, S, E)
    m = jnp.squeeze(mask, axis=1).astype(jnp.float32)            # (B, S)
    B, S, E = x.shape
    H = params["w1"].shape[1]
    nh = num_heads
    hd = E // nh
    m = m.reshape(B, 1, S)

    if tq is None:
        tq = min(128, S)
    assert S % tq == 0, "S must be divisible by the query tile"
    n_q = S // tq

    # --- parameter prep (one-time, wrapper-side) ---
    scale = 1.0 / (hd ** 0.5)
    wqkv = params["wqkv"].astype(jnp.float32).at[:, :E].multiply(scale)
    bqkv = params["bqkv"].astype(jnp.float32).at[:, :E].multiply(scale)
    wqkv_bf = wqkv.astype(jnp.bfloat16)
    wo_h_bf = params["wo"].astype(jnp.bfloat16).reshape(nh, hd, E)
    w1_bf = params["w1"].astype(jnp.bfloat16)
    w2_bf = params["w2"].astype(jnp.bfloat16)
    bo = params["bo"].astype(jnp.float32)
    b1 = params["b1"].astype(jnp.float32)
    b2 = params["b2"].astype(jnp.float32)
    g = params["ln_g"].astype(jnp.float32)
    be = params["ln_b"].astype(jnp.float32)

    cparams = pltpu.CompilerParams(
        dimension_semantics=("parallel", "parallel"),
        vmem_limit_bytes=64 * 1024 * 1024,
    )
    wmap = lambda b, i: (0, 0)

    # --- stage 1: QKV projection, tiled over (batch, sequence tile) ---
    qkv_cost = pl.CostEstimate(
        flops=2 * B * S * E * 3 * E,
        transcendentals=0,
        bytes_accessed=B * S * E * 4 + E * 3 * E * 2 + 3 * E * 4 + 3 * B * S * E * 2,
    )
    q, k, v = pl.pallas_call(
        qkv_proj_kernel,
        out_shape=tuple(jax.ShapeDtypeStruct((B, S, E), jnp.bfloat16) for _ in range(3)),
        grid_spec=pltpu.PrefetchScalarGridSpec(
            num_scalar_prefetch=0,
            grid=(B, n_q),
            in_specs=[
                pl.BlockSpec((None, tq, E), lambda b, i: (b, i, 0)),   # x tile
                pl.BlockSpec((E, 3 * E), wmap),                        # wqkv (bf16)
                pl.BlockSpec((1, 3 * E), wmap),                        # bqkv (f32)
            ],
            out_specs=tuple(pl.BlockSpec((None, tq, E), lambda b, i: (b, i, 0))
                            for _ in range(3)),
        ),
        compiler_params=cparams,
        cost_estimate=qkv_cost,
    )(x, wqkv_bf, bqkv)

    # head-major layout for attention (cheap XLA relayout on HBM; keeps the kernel
    # free of tiled-dim transposes)
    def to_heads(t):
        return t.reshape(B, S, nh, hd).transpose(0, 2, 1, 3)     # (B, nh, S, hd)

    qh, kh, vh = to_heads(q), to_heads(k), to_heads(v)

    # --- stage 2: attention + MLP, tiled over (batch, query tile) ---
    attn_cost = pl.CostEstimate(
        flops=B * (4 * S * S * E + 2 * S * E * E + 4 * S * E * H),
        transcendentals=B * nh * S * S,
        bytes_accessed=(2 * B * S * E * 4 + 3 * B * S * E * 2 + B * S * 4
                        + (E * E + 2 * E * H) * 2 + (4 * E + H) * 4),
    )
    out = pl.pallas_call(
        attn_ffn_kernel,
        out_shape=jax.ShapeDtypeStruct((B, S, E), jnp.float32),
        grid_spec=pltpu.PrefetchScalarGridSpec(
            num_scalar_prefetch=0,
            grid=(B, n_q),
            in_specs=[
                pl.BlockSpec((None, tq, E), lambda b, i: (b, i, 0)),         # x residual
                pl.BlockSpec((None, nh, tq, hd), lambda b, i: (b, 0, i, 0)),  # q heads
                pl.BlockSpec((None, nh, S, hd), lambda b, i: (b, 0, 0, 0)),   # k heads
                pl.BlockSpec((None, nh, S, hd), lambda b, i: (b, 0, 0, 0)),   # v heads
                pl.BlockSpec((None, 1, S), lambda b, i: (b, 0, 0)),           # mask
                pl.BlockSpec((nh, hd, E), lambda b, i: (0, 0, 0)),            # wo per-head
                pl.BlockSpec((1, E), wmap),                                   # bo
                pl.BlockSpec((1, E), wmap),                                   # ln gamma
                pl.BlockSpec((1, E), wmap),                                   # ln beta
                pl.BlockSpec((E, H), wmap),                                   # w1
                pl.BlockSpec((1, H), wmap),                                   # b1
                pl.BlockSpec((H, E), wmap),                                   # w2
                pl.BlockSpec((1, E), wmap),                                   # b2
            ],
            out_specs=pl.BlockSpec((None, tq, E), lambda b, i: (b, i, 0)),
        ),
        compiler_params=cparams,
        cost_estimate=attn_cost,
    )(x, qh, kh, vh, m, wo_h_bf, bo, g, be, w1_bf, b1, w2_bf, b2)
    return out


# ---------------------------------------------------------------------------
# Plain-JAX reference (mirrors the bf16 matmul-input policy of the kernel).
# ---------------------------------------------------------------------------
def encoder_layer_ref(embeddings, mask, params, num_heads):
    bf = jnp.bfloat16
    x = jnp.squeeze(embeddings, axis=1).astype(jnp.float32)
    m = jnp.squeeze(mask, axis=1).astype(jnp.float32)
    B, S, E = x.shape
    hd = E // num_heads

    wqkv = params["wqkv"].astype(bf)
    wo = params["wo"].astype(bf)
    w1 = params["w1"].astype(bf)
    w2 = params["w2"].astype(bf)

    qkv = jnp.dot(x.astype(bf), wqkv,
                  preferred_element_type=jnp.float32) + params["bqkv"]
    q, k, v = qkv[..., :E], qkv[..., E:2 * E], qkv[..., 2 * E:]
    q, k, v = q.astype(bf), k.astype(bf), v.astype(bf)

    def split(t):
        return t.reshape(B, S, num_heads, hd).transpose(0, 2, 1, 3)  # (B, nh, S, hd)

    qh, kh, vh = split(q), split(k), split(v)
    s = jnp.einsum("bhqd,bhkd->bhqk", qh, kh,
                   preferred_element_type=jnp.float32) / (hd ** 0.5)
    s = s + (m * -1e9)[:, None, None, :]
    p = jax.nn.softmax(s, axis=-1)
    attn = jnp.einsum("bhqk,bhkd->bhqd", p.astype(bf), vh,
                      preferred_element_type=jnp.float32)
    attn = attn.transpose(0, 2, 1, 3).reshape(B, S, E)
    interacted = jnp.dot(attn.astype(bf), wo,
                         preferred_element_type=jnp.float32) + params["bo"]

    def ln(t):
        mu = jnp.mean(t, axis=-1, keepdims=True)
        var = jnp.mean((t - mu) ** 2, axis=-1, keepdims=True)
        return (t - mu) * jax.lax.rsqrt(var + LN_EPS) * params["ln_g"] + params["ln_b"]

    inter = ln(x + interacted)
    h1 = jax.nn.relu(jnp.dot(inter.astype(bf), w1,
                             preferred_element_type=jnp.float32) + params["b1"])
    mlp = jnp.dot(h1.astype(bf), w2,
                  preferred_element_type=jnp.float32) + params["b2"]
    return ln(mlp + inter)


def init_params(key, embed_dim, hidden):
    keys = jax.random.split(key, 8)
    s = 0.02
    return {
        # in_proj weight stored transposed: y = x @ wqkv + bqkv
        "wqkv": jax.random.normal(keys[0], (embed_dim, 3 * embed_dim), jnp.float32) * s,
        "bqkv": jax.random.normal(keys[1], (1, 3 * embed_dim), jnp.float32) * s,
        "wo":   jax.random.normal(keys[2], (embed_dim, embed_dim), jnp.float32) * s,
        "bo":   jax.random.normal(keys[3], (1, embed_dim), jnp.float32) * s,
        "ln_g": jnp.ones((1, embed_dim), jnp.float32),
        "ln_b": jnp.zeros((1, embed_dim), jnp.float32),
        "w1":   jax.random.normal(keys[4], (embed_dim, hidden), jnp.float32) * s,
        "b1":   jax.random.normal(keys[5], (1, hidden), jnp.float32) * s,
        "w2":   jax.random.normal(keys[6], (hidden, embed_dim), jnp.float32) * s,
        "b2":   jax.random.normal(keys[7], (1, embed_dim), jnp.float32) * s,
    }


if __name__ == "__main__":
    B, S, E = 2, 8, 32
    num_heads = 4
    hidden = 4 * E

    key = jax.random.PRNGKey(0)
    k_emb, k_par = jax.random.split(key)

    embeddings = jax.random.normal(k_emb, (B, 1, S, E), jnp.float32)
    # key_padding_mask: last two keys of batch 1 are padded
    mask = jnp.zeros((B, 1, S), jnp.float32).at[1, 0, -2:].set(1.0)

    params = init_params(k_par, E, hidden)

    out = encoder_layer(embeddings, mask, params, num_heads)
    out = jax.block_until_ready(out)

    ref = encoder_layer_ref(embeddings, mask, params, num_heads)
    assert out.shape == (B, S, E)
    max_err = float(jnp.max(jnp.abs(out - ref)))
    assert jnp.allclose(out, ref, atol=5e-3, rtol=5e-3), f"mismatch vs ref: {max_err}"

    print("KERNEL_OK")
</pallas_src>

<mosaic_0001>
module attributes {stable_mosaic.version = 11 : i64} {
  func.func @qkv_proj_kernel(%arg0: i32, %arg1: i32, %arg2: memref<1x8x32xf32, #tpu.memory_space<vmem>>, %arg3: memref<32x96xbf16, #tpu.memory_space<vmem>>, %arg4: memref<1x96xf32, #tpu.memory_space<vmem>>, %arg5: memref<1x8x32xbf16, #tpu.memory_space<vmem>>, %arg6: memref<1x8x32xbf16, #tpu.memory_space<vmem>>, %arg7: memref<1x8x32xbf16, #tpu.memory_space<vmem>>) attributes {dimension_semantics = [#tpu.dimension_semantics<parallel>, #tpu.dimension_semantics<parallel>], iteration_bounds = array<i64: 2, 1>, scalar_prefetch = 0 : i64, scratch_operands = 0 : i64, tpu.core_type = #tpu.core_type<tc>, window_params = [{transform_indices = @transform_0, window_bounds = array<i64: 1, 8, 32>}, {pipeline_mode = #tpu.pipeline_mode<synchronous>, transform_indices = @transform_1, window_bounds = array<i64: 32, 96>}, {pipeline_mode = #tpu.pipeline_mode<synchronous>, transform_indices = @transform_2, window_bounds = array<i64: 1, 96>}, {transform_indices = @transform_3, window_bounds = array<i64: 1, 8, 32>}, {transform_indices = @transform_4, window_bounds = array<i64: 1, 8, 32>}, {transform_indices = @transform_5, window_bounds = array<i64: 1, 8, 32>}]} {
    %c0 = arith.constant 0 : index
    %c0_0 = arith.constant 0 : index
    %c0_1 = arith.constant 0 : index
    %0 = vector.load %arg2[%c0, %c0_0, %c0_1] : memref<1x8x32xf32, #tpu.memory_space<vmem>>, vector<1x8x32xf32>
    %1 = vector.shape_cast %0 : vector<1x8x32xf32> to vector<8x32xf32>
    %2 = arith.truncf %1 : vector<8x32xf32> to vector<8x32xbf16>
    %c0_2 = arith.constant 0 : index
    %c0_3 = arith.constant 0 : index
    %3 = vector.load %arg3[%c0_2, %c0_3] : memref<32x96xbf16, #tpu.memory_space<vmem>>, vector<32x96xbf16>
    %cst = arith.constant dense<0.000000e+00> : vector<8x96xf32>
    %4 = tpu.matmul %2, %3, %cst {dimension_numbers = #tpu.dot_dimension_numbers<[1], [0], [0], [1], [0, 0, 1, 1], [], []>} : vector<8x32xbf16>, vector<32x96xbf16>, vector<8x96xf32> -> vector<8x96xf32>
    %c0_4 = arith.constant 0 : index
    %c0_5 = arith.constant 0 : index
    %5 = vector.load %arg4[%c0_4, %c0_5] : memref<1x96xf32, #tpu.memory_space<vmem>>, vector<1x96xf32>
    %6 = vector.broadcast %5 : vector<1x96xf32> to vector<8x96xf32>
    %7 = arith.addf %4, %6 : vector<8x96xf32>
    %8 = vector.extract_strided_slice %7 {offsets = [0, 0], sizes = [8, 32], strides = [1, 1]} : vector<8x96xf32> to vector<8x32xf32>
    %9 = arith.truncf %8 : vector<8x32xf32> to vector<8x32xbf16>
    %c0_6 = arith.constant 0 : index
    %c0_7 = arith.constant 0 : index
    %c0_8 = arith.constant 0 : index
    %10 = vector.load %arg5[%c0_6, %c0_7, %c0_8] : memref<1x8x32xbf16, #tpu.memory_space<vmem>>, vector<1x8x32xbf16>
    %11 = vector.shape_cast %10 : vector<1x8x32xbf16> to vector<8x32xbf16>
    %12 = vector.shape_cast %9 : vector<8x32xbf16> to vector<1x8x32xbf16>
    tpu.vector_store %arg5[%c0_6, %c0_7, %c0_8], %12 {strides = array<i32>} : memref<1x8x32xbf16, #tpu.memory_space<vmem>>, vector<1x8x32xbf16>,
    %13 = vector.extract_strided_slice %7 {offsets = [0, 32], sizes = [8, 32], strides = [1, 1]} : vector<8x96xf32> to vector<8x32xf32>
    %14 = arith.truncf %13 : vector<8x32xf32> to vector<8x32xbf16>
    %c0_9 = arith.constant 0 : index
    %c0_10 = arith.constant 0 : index
    %c0_11 = arith.constant 0 : index
    %15 = vector.load %arg6[%c0_9, %c0_10, %c0_11] : memref<1x8x32xbf16, #tpu.memory_space<vmem>>, vector<1x8x32xbf16>
    %16 = vector.shape_cast %15 : vector<1x8x32xbf16> to vector<8x32xbf16>
    %17 = vector.shape_cast %14 : vector<8x32xbf16> to vector<1x8x32xbf16>
    tpu.vector_store %arg6[%c0_9, %c0_10, %c0_11], %17 {strides = array<i32>} : memref<1x8x32xbf16, #tpu.memory_space<vmem>>, vector<1x8x32xbf16>,
    %18 = vector.extract_strided_slice %7 {offsets = [0, 64], sizes = [8, 32], strides = [1, 1]} : vector<8x96xf32> to vector<8x32xf32>
    %19 = arith.truncf %18 : vector<8x32xf32> to vector<8x32xbf16>
    %c0_12 = arith.constant 0 : index
    %c0_13 = arith.constant 0 : index
    %c0_14 = arith.constant 0 : index
    %20 = vector.load %arg7[%c0_12, %c0_13, %c0_14] : memref<1x8x32xbf16, #tpu.memory_space<vmem>>, vector<1x8x32xbf16>
    %21 = vector.shape_cast %20 : vector<1x8x32xbf16> to vector<8x32xbf16>
    %22 = vector.shape_cast %19 : vector<8x32xbf16> to vector<1x8x32xbf16>
    tpu.vector_store %arg7[%c0_12, %c0_13, %c0_14], %22 {strides = array<i32>} : memref<1x8x32xbf16, #tpu.memory_space<vmem>>, vector<1x8x32xbf16>,
    return
  }
  func.func @transform_0(%arg0: i32, %arg1: i32) -> (i32, i32, i32) {
    %c0_i32 = arith.constant 0 : i32
    %c0_i32_0 = arith.constant 0 : i32
    return %arg0, %arg1, %c0_i32 : i32, i32, i32
  }
  func.func @transform_1(%arg0: i32, %arg1: i32) -> (i32, i32) {
    %c0_i32 = arith.constant 0 : i32
    %c0_i32_0 = arith.constant 0 : i32
    %c0_i32_1 = arith.constant 0 : i32
    return %c0_i32, %c0_i32_0 : i32, i32
  }
  func.func @transform_2(%arg0: i32, %arg1: i32) -> (i32, i32) {
    %c0_i32 = arith.constant 0 : i32
    %c0_i32_0 = arith.constant 0 : i32
    %c0_i32_1 = arith.constant 0 : i32
    return %c0_i32, %c0_i32_0 : i32, i32
  }
  func.func @transform_3(%arg0: i32, %arg1: i32) -> (i32, i32, i32) {
    %c0_i32 = arith.constant 0 : i32
    %c0_i32_0 = arith.constant 0 : i32
    return %arg0, %arg1, %c0_i32 : i32, i32, i32
  }
  func.func @transform_4(%arg0: i32, %arg1: i32) -> (i32, i32, i32) {
    %c0_i32 = arith.constant 0 : i32
    %c0_i32_0 = arith.constant 0 : i32
    return %arg0, %arg1, %c0_i32 : i32, i32, i32
  }
  func.func @transform_5(%arg0: i32, %arg1: i32) -> (i32, i32, i32) {
    %c0_i32 = arith.constant 0 : i32
    %c0_i32_0 = arith.constant 0 : i32
    return %arg0, %arg1, %c0_i32 : i32, i32, i32
  }
}

</mosaic_0001>

<llo_original>
// kernel: tpu_custom_call.1
$region0: #{tpu_custom_call.1}
  #allocation0 [shape = 'u32[]', space=smem, size = 0x4, offset = 0x4, fixed_abs, tag = 'smem constant byte address 0x4 - core index']
  #allocation1 [shape = 'u32[144,128]{1,0:T(1,128)}', space=vmem, size = 0x12000, scoped, tag = 'internal scratch']
  %s0 = inlined_call_operand.hbm [shape: f32[2,8,32], index: 0, kind: input, shape index: {}]
  %s1 = inlined_call_operand.hbm [shape: bf16[32,96], index: 1, kind: input, shape index: {}]
  %s2 = inlined_call_operand.vmem [shape: f32[1,96], index: 2, kind: input, shape index: {}]
  %s3 = inlined_call_operand.hbm [shape: bf16[2,8,32], index: 3, kind: output, shape index: {0}]
  %s4 = inlined_call_operand.hbm [shape: bf16[2,8,32], index: 4, kind: output, shape index: {1}]
  %s5 = inlined_call_operand.hbm [shape: bf16[2,8,32], index: 5, kind: output, shape index: {2}]
  %6 = xla_tuple %s3, %s4, %s5
  %s7 = sld [smem:[#allocation0]]
  $region69: #{tpu_custom_call.1} parent=0
    _
  %s9 = ssub.s32 1, %s7
  %s10 = scalar_select 0, %s9, %s7
  $region1: #{tpu_custom_call.1} parent=0
    #allocation2 [shape = 'u8[8192]{0}', space=vmem, size = 0x2000, scoped, tag = 'input window, operand 0']
    #allocation3 [shape = 's32[2]{0}', space=sflag, size = 0x8, scoped, tag = 'scoped memory for tpu_custom_call.1']
    #allocation4 [shape = 's32[2]{0}', space=sflag, size = 0x8, scoped, tag = 'scoped memory for tpu_custom_call.1']
    #allocation5 [shape = 'u8[8192]{0}', space=vmem, size = 0x2000, scoped, tag = 'input window, operand 1, single buffered']
    #allocation6 [shape = 's32[1]{0}', space=sflag, size = 0x4, scoped, tag = 'scoped memory for tpu_custom_call.1']
    #allocation7 [shape = 'u8[4096]{0}', space=vmem, size = 0x1000, scoped, tag = 'output window, operand 0']
    #allocation8 [shape = 'u8[4096]{0}', space=vmem, size = 0x1000, scoped, tag = 'output window, operand 1']
    #allocation9 [shape = 's32[2]{0}', space=sflag, size = 0x8, scoped, tag = 'scoped memory for tpu_custom_call.1']
    #allocation10 [shape = 'u8[4096]{0}', space=vmem, size = 0x1000, scoped, tag = 'output window, operand 2']
    %11 = vsyncpa [#allocation3], 0
    %s12 = scalar_lea.sflag [#allocation3], 1
    %13 = vsyncpa %s12, 0
    %14 = vsyncpa [#allocation6], 0
    %15 = vsyncpa [#allocation4], 0
    %s16 = scalar_lea.sflag [#allocation4], 1
    %17 = vsyncpa %s16, 0
    %18 = vsyncpa [#allocation9], 0
    %s19 = scalar_lea.sflag [#allocation9], 1
    %20 = vsyncpa %s19, 0
    loop: start=0, step=1, limit=4
    $region2: #{tpu_custom_call.1} parent=1 // loop_pre_header
      _
    $region3: #{tpu_custom_call.1} parent=1 // loop_header
      %s22 = sphi 0, %s26
      %p23 = scmp.ge.s32.totalorder %s22, 4
      %s29 = sphi 0, %s41
      %s30 = sphi 0, %s37
      %s31 = sphi 0, %s29
      %s32 = sphi 0, %s30
      %s33 = sphi 0, %s31
      %s34 = sphi 0, %s32
      %s46 = sphi 0, %s48
      %s49 = sphi 0, %s46
      %s50 = sphi 0, %s49
      %s66 = sphi 0, %s50
      %s70 = sphi 0, %s70
      %s72 = sphi 0, %s70
      %s73 = sphi 0, %s72
      %s87 = sphi 0, %s73
      %s91 = sphi 0, %s91
      %s93 = sphi 0, %s91
      %s94 = sphi 0, %s93
      %s108 = sphi 0, %s94
      %s116 = sphi 0, %s118
      %s119 = sphi 0, %s116
      %s120 = sphi 0, %s119
      %s136 = sphi 0, %s120
      %s144 = sphi 0, %s146
      %s147 = sphi 0, %s144
      %s148 = sphi 0, %s147
      %s164 = sphi 0, %s148
      %s172 = sphi 0, %s174
      %s175 = sphi 0, %s172
      %s176 = sphi 0, %s175
      %s192 = sphi 0, %s176
    $region4: #{tpu_custom_call.1} parent=1 // loop_header_branch
      %25 = sbr.rel (%p23) target = $region8
    $region5: #{tpu_custom_call.1} parent=1 // loop_body
      %s27 = ssub.s32 %s22, 1
      %s28 = ssub.s32 %s22, 2
      %s35 = sadd.s32 1, %s30
      %p36 = scmp.ge.s32.totalorder %s35, 1
      %s37 = scalar_select %p36, 0, %s35
      %s38 = sadd.s32 1, %s29
      %s39 = scalar_select %p36, %s38, %s29
      %p40 = scmp.ge.s32.totalorder %s39, 2
      %s41 = scalar_select %p40, 0, %s39
      %s42 = ssub.s32 %s29, %s41
      %s43 = ssub.s32 %s30, %s37
      %s44 = sor.u32 %s42, %s43
      %p45 = scmp.eq.s32.totalorder %s44, 0
      %s47 = sadd.s32 %s46, 1
      %s48 = scalar_select %p45, %s46, %s47
      %p51 = pneg %p45
      %p52 = scmp.eq.s32.totalorder %s22, 1
      %p53 = por %p51, %p52
      %p54 = scmp.ne.s32.totalorder %s46, %s49
      %p55 = scmp.eq.s32.totalorder %s22, 0
      %p56 = por %p54, %p55
      %p57 = scmp.ne.s32.totalorder %s46, %s49
      %p58 = scmp.eq.s32.totalorder %s27, 1
      %p59 = por %p57, %p58
      %p60 = scmp.ne.s32.totalorder %s49, %s50
      %p61 = scmp.eq.s32.totalorder %s27, 0
      %p62 = por %p60, %p61
      %p63 = scmp.ne.s32.totalorder %s49, %s50
      %p64 = scmp.eq.s32.totalorder %s28, 1
      %p65 = por %p63, %p64
      %p67 = scmp.ne.s32.totalorder %s50, %s66
      %p68 = scmp.eq.s32.totalorder %s28, 0
      %p69 = por %p67, %p68
      %s71 = sadd.s32 %s70, 1
      %p74 = scmp.eq.s32.totalorder %s22, 1
      %p75 = scmp.ne.s32.totalorder %s70, %s72
      %p76 = scmp.eq.s32.totalorder %s22, 0
      %p77 = por %p75, %p76
      %p78 = scmp.ne.s32.totalorder %s70, %s72
      %p79 = scmp.eq.s32.totalorder %s27, 1
      %p80 = por %p78, %p79
      %p81 = scmp.ne.s32.totalorder %s72, %s73
      %p82 = scmp.eq.s32.totalorder %s27, 0
      %p83 = por %p81, %p82
      %p84 = scmp.ne.s32.totalorder %s72, %s73
      %p85 = scmp.eq.s32.totalorder %s28, 1
      %p86 = por %p84, %p85
      %p88 = scmp.ne.s32.totalorder %s73, %s87
      %p89 = scmp.eq.s32.totalorder %s28, 0
      %p90 = por %p88, %p89
      %s92 = sadd.s32 %s91, 1
      %p95 = scmp.eq.s32.totalorder %s22, 1
      %p96 = scmp.ne.s32.totalorder %s91, %s93
      %p97 = scmp.eq.s32.totalorder %s22, 0
      %p98 = por %p96, %p97
      %p99 = scmp.ne.s32.totalorder %s91, %s93
      %p100 = scmp.eq.s32.totalorder %s27, 1
      %p101 = por %p99, %p100
      %p102 = scmp.ne.s32.totalorder %s93, %s94
      %p103 = scmp.eq.s32.totalorder %s27, 0
      %p104 = por %p102, %p103
      %p105 = scmp.ne.s32.totalorder %s93, %s94
      %p106 = scmp.eq.s32.totalorder %s28, 1
      %p107 = por %p105, %p106
      %p109 = scmp.ne.s32.totalorder %s94, %s108
      %p110 = scmp.eq.s32.totalorder %s28, 0
      %p111 = por %p109, %p110
      %s112 = ssub.s32 %s29, %s41
      %s113 = ssub.s32 %s30, %s37
      %s114 = sor.u32 %s112, %s113
      %p115 = scmp.eq.s32.totalorder %s114, 0
      %s117 = sadd.s32 %s116, 1
      %s118 = scalar_select %p115, %s116, %s117
      %p121 = pneg %p115
      %p122 = scmp.eq.s32.totalorder %s22, 1
      %p123 = por %p121, %p122
      %p124 = scmp.ne.s32.totalorder %s116, %s119
      %p125 = scmp.eq.s32.totalorder %s22, 0
      %p126 = por %p124, %p125
      %p127 = scmp.ne.s32.totalorder %s116, %s119
      %p128 = scmp.eq.s32.totalorder %s27, 1
      %p129 = por %p127, %p128
      %p130 = scmp.ne.s32.totalorder %s119, %s120
      %p131 = scmp.eq.s32.totalorder %s27, 0
      %p132 = por %p130, %p131
      %p133 = scmp.ne.s32.totalorder %s119, %s120
      %p134 = scmp.eq.s32.totalorder %s28, 1
      %p135 = por %p133, %p134
      %p137 = scmp.ne.s32.totalorder %s120, %s136
      %p138 = scmp.eq.s32.totalorder %s28, 0
      %p139 = por %p137, %p138
      %s140 = ssub.s32 %s29, %s41
      %s141 = ssub.s32 %s30, %s37
      %s142 = sor.u32 %s140, %s141
      %p143 = scmp.eq.s32.totalorder %s142, 0
      %s145 = sadd.s32 %s144, 1
      %s146 = scalar_select %p143, %s144, %s145
      %p149 = pneg %p143
      %p150 = scmp.eq.s32.totalorder %s22, 1
      %p151 = por %p149, %p150
      %p152 = scmp.ne.s32.totalorder %s144, %s147
      %p153 = scmp.eq.s32.totalorder %s22, 0
      %p154 = por %p152, %p153
      %p155 = scmp.ne.s32.totalorder %s144, %s147
      %p156 = scmp.eq.s32.totalorder %s27, 1
      %p157 = por %p155, %p156
      %p158 = scmp.ne.s32.totalorder %s147, %s148
      %p159 = scmp.eq.s32.totalorder %s27, 0
      %p160 = por %p158, %p159
      %p161 = scmp.ne.s32.totalorder %s147, %s148
      %p162 = scmp.eq.s32.totalorder %s28, 1
      %p163 = por %p161, %p162
      %p165 = scmp.ne.s32.totalorder %s148, %s164
      %p166 = scmp.eq.s32.totalorder %s28, 0
      %p167 = por %p165, %p166
      %s168 = ssub.s32 %s29, %s41
      %s169 = ssub.s32 %s30, %s37
      %s170 = sor.u32 %s168, %s169
      %p171 = scmp.eq.s32.totalorder %s170, 0
      %s173 = sadd.s32 %s172, 1
      %s174 = scalar_select %p171, %s172, %s173
      %p177 = pneg %p171
      %p178 = scmp.eq.s32.totalorder %s22, 1
      %p179 = por %p177, %p178
      %p180 = scmp.ne.s32.totalorder %s172, %s175
      %p181 = scmp.eq.s32.totalorder %s22, 0
      %p182 = por %p180, %p181
      %p183 = scmp.ne.s32.totalorder %s172, %s175
      %p184 = scmp.eq.s32.totalorder %s27, 1
      %p185 = por %p183, %p184
      %p186 = scmp.ne.s32.totalorder %s175, %s176
      %p187 = scmp.eq.s32.totalorder %s27, 0
      %p188 = por %p186, %p187
      %p189 = scmp.ne.s32.totalorder %s175, %s176
      %p190 = scmp.eq.s32.totalorder %s28, 1
      %p191 = por %p189, %p190
      %p193 = scmp.ne.s32.totalorder %s176, %s192
      %p194 = scmp.eq.s32.totalorder %s28, 0
      %p195 = por %p193, %p194
      %p196 = scmp.le.s32.totalorder 1, %s22
      %p197 = scmp.lt.s32.totalorder %s22, 3
      %p198 = pnand %p196, %p197
      %p199 = pneg %p198
      // Predicated region
      $region9: #{tpu_custom_call.1} parent=5 // pred_check
        _
      $region10: #{tpu_custom_call.1} parent=5 // pred_check_branch
        %201 = sbr.rel (%p198) target = $region12
      $region11: #{tpu_custom_call.1} parent=5 // pred_region
        %s202 = ssub.s32 %s22, 1
        // Predicated region
        $region13: #{tpu_custom_call.1} parent=11 // pred_check
          %p203 = pneg %p83
        $region14: #{tpu_custom_call.1} parent=11 // pred_check_branch
          %205 = sbr.rel (%p203) target = $region16
        $region15: #{tpu_custom_call.1} parent=11 // pred_region
          %s207 = ssub.s32 256, 256
          %208 = vsyncadd [#allocation6], %s207
          %s209 = sshll.u32 [#allocation5], 4
          %s210 = int_to_ptr.vmem [resolvable:$true] %s209
          %215 = dma.hbm_to_vmem [thread:$0]  %s1, 256, %s210, [#allocation6], 64, 64, 4
        $region16: #{tpu_custom_call.1} parent=11 // pred_fallthru
          _
        // Predicated region
        $region17: #{tpu_custom_call.1} parent=11 // pred_check
          %p216 = pneg %p104
        $region18: #{tpu_custom_call.1} parent=11 // pred_check_branch
          %218 = sbr.rel (%p216) target = $region20
        $region19: #{tpu_custom_call.1} parent=11 // pred_region
          _
        $region20: #{tpu_custom_call.1} parent=11 // pred_fallthru
          _
      $region12: #{tpu_custom_call.1} parent=5 // pred_fallthru
        _
      %p219 = scmp.lt.s32.totalorder %s22, 2
      // Predicated region
      $region21: #{tpu_custom_call.1} parent=5 // pred_check
        %p220 = pneg %p219
      $region22: #{tpu_custom_call.1} parent=5 // pred_check_branch
        %222 = sbr.rel (%p220) target = $region24
      $region23: #{tpu_custom_call.1} parent=5 // pred_region
        // Predicated region
        $region25: #{tpu_custom_call.1} parent=23 // pred_check
          %p223 = pneg %p56
        $region26: #{tpu_custom_call.1} parent=23 // pred_check_branch
          %225 = sbr.rel (%p223) target = $region28
        $region27: #{tpu_custom_call.1} parent=23 // pred_region
          %s226 = sand.u32 %s46, 1
          %s227 = scalar_lea.sflag [#allocation3], %s226
          %s228 = sand.u32 %s46, 1
          %s229 = smul.addr %s228, 8
          %s230 = scalar_lea.vmem [#allocation2], %s229
          %s232 = ssub.s32 128, 128
          %233 = vsyncadd %s227, %s232
          %s234 = sadd.s32 %s30, %s29
          %s235 = smul.addr %s234, 128
          %s236 = scalar_lea.hbm %s0, %s235
          %s238 = sshll.u32 %s230, 4
          %s239 = int_to_ptr.vmem [resolvable:$true] %s238
          %241 = dma.hbm_to_vmem [thread:$0]  %s236, 128, %s239, %s227
        $region28: #{tpu_custom_call.1} parent=23 // pred_fallthru
          _
      $region24: #{tpu_custom_call.1} parent=5 // pred_fallthru
        _
      %p242 = scmp.le.s32.totalorder 1, %s22
      %p243 = scmp.lt.s32.totalorder %s22, 3
      %p244 = pnand %p242, %p243
      %p245 = pneg %p244
      // Predicated region
      $region29: #{tpu_custom_call.1} parent=5 // pred_check
        _
      $region30: #{tpu_custom_call.1} parent=5 // pred_check_branch
        %247 = sbr.rel (%p244) target = $region32
      $region31: #{tpu_custom_call.1} parent=5 // pred_region
        %s248 = ssub.s32 %s22, 1
        %s249 = sand.u32 %s49, 1
        %s250 = scalar_lea.sflag [#allocation3], %s249
        %s251 = sand.u32 %s49, 1
        %s252 = smul.addr %s251, 8
        %s253 = scalar_lea.vmem [#allocation2], %s252
        // Predicated region
        $region33: #{tpu_custom_call.1} parent=31 // pred_check
          %p254 = pneg %p62
        $region34: #{tpu_custom_call.1} parent=31 // pred_check_branch
          %256 = sbr.rel (%p254) target = $region36
        $region35: #{tpu_custom_call.1} parent=31 // pred_region
          %257 = dma.done %s250, 128
        $region36: #{tpu_custom_call.1} parent=31 // pred_fallthru
          _
        // Predicated region
        $region37: #{tpu_custom_call.1} parent=31 // pred_check
          %p258 = pneg %p83
        $region38: #{tpu_custom_call.1} parent=31 // pred_check_branch
          %260 = sbr.rel (%p258) target = $region40
        $region39: #{tpu_custom_call.1} parent=31 // pred_region
          %261 = dma.done [#allocation6], 256
        $region40: #{tpu_custom_call.1} parent=31 // pred_fallthru
          _
        %s262 = sand.u32 %s49, 1
        %s263 = scalar_lea.sflag [#allocation3], %s262
        %s264 = sand.u32 %s49, 1
        %s265 = smul.addr %s264, 8
        %s266 = scalar_lea.vmem [#allocation2], %s265
        %p267 = pneg %p62
        %p268 = pneg %p59
        %p269 = pneg %p83
        %p270 = pneg %p80
        %p271 = pneg %p104
        %p272 = pneg %p101
        %p273 = pneg %p132
        %p274 = pneg %p129
        %s275 = sand.u32 %s119, 1
        %s276 = scalar_lea.sflag [#allocation4], %s275
        %s277 = sand.u32 %s119, 1
        %s278 = smul.addr %s277, 4
        %s279 = scalar_lea.vmem [#allocation7], %s278
        %p280 = pneg %p160
        %p281 = pneg %p157
        %s282 = sand.u32 %s27, 1
        %s283 = scalar_lea.sflag [#allocation9], %s282
        %s284 = sand.u32 %s147, 1
        %s285 = smul.addr %s284, 4
        %s286 = scalar_lea.vmem [#allocation8], %s285
        %p287 = pneg %p188
        %p288 = pneg %p185
        %s289 = sand.u32 %s27, 1
        %s290 = scalar_lea.sflag [#allocation9], %s289
        %s291 = sand.u32 %s175, 1
        %s292 = smul.addr %s291, 4
        %s293 = scalar_lea.vmem [#allocation10], %s292
        %v295 = vld [vmem:[%s253] sm:$0xff]
        %v296 = vpack.c.bf16 %v295, %v295
        %v297 = vld [vmem:[#allocation5] sm:$0xf]
        %v298 = vld [vmem:[#allocation5 + $0x4] sm:$0xf]
        %v299 = vld [vmem:[#allocation5 + $0x8] sm:$0xf]
        %v300 = vld [vmem:[#allocation5 + $0xc] sm:$0xf]
        %v301 = vld [vmem:[%s2] sm:$0x1]
        %v303 = vlaneseq
        %v304 = vshrl.u32 %v303, 7
        %v305 = vsub.s32 0, %v304
        %v306 = vrot.slane %v301, %v305
        %v312 = vunpack.c.l.b16 %v297
        %v313 = vunpack.c.l.b16 %v298
        %v314 = vunpack.c.l.b16 %v299
        %v315 = vunpack.c.l.b16 %v300
        %v316 = vpack.c.b16 %v313, %v312
        %v317 = vpack.c.b16 %v315, %v314
        %vm320 = vcmask 261120
        %v322 = vsel %vm320, %v296, 0
        %324 = vmatprep.subr.bf16.mxu0 0
        %325 = vmatpush1.bf16.msra.mxu0 0
        %326 = vmatprep.subr.bf16.mxu0 0
        %327 = vmatpush1.bf16.msra.mxu0 0
        %328 = vmatprep.subr.bf16.mxu0 0
        %329 = vmatpush1.bf16.msra.mxu0 0
        %330 = vmatprep.subr.bf16.mxu0 0
        %331 = vmatpush1.bf16.msra.mxu0 0
        %332 = vmatprep.subr.bf16.mxu0 0
        %333 = vmatpush1.bf16.msra.mxu0 0
        %334 = vmatprep.subr.bf16.mxu0 0
        %335 = vmatpush1.bf16.msra.mxu0 0
        %336 = vmatprep.subr.bf16.mxu0 0
        %337 = vmatpush1.bf16.msra.mxu0 %v317
        %338 = vmatprep.subr.bf16.mxu0 0
        %339 = vmatpush1.bf16.msra.mxu0 %v316
        %340 = vmatprep.subr.bf16.mxu0 0
        %341 = vmatpush2.bf16.msra.mxu0 0
        %342 = vmatprep.subr.bf16.mxu0 0
        %343 = vmatpush2.bf16.msra.mxu0 0
        %344 = vmatprep.subr.bf16.mxu0 0
        %345 = vmatpush2.bf16.msra.mxu0 0
        %346 = vmatprep.subr.bf16.mxu0 0
        %347 = vmatpush2.bf16.msra.mxu0 0
        %348 = vmatprep.subr.bf16.mxu0 0
        %349 = vmatpush2.bf16.msra.mxu0 0
        %350 = vmatprep.subr.bf16.mxu0 0
        %351 = vmatpush2.bf16.msra.mxu0 0
        %352 = vmatprep.subr.bf16.mxu0 0
        %353 = vmatpush2.bf16.msra.mxu0 0
        %354 = vmatprep.subr.bf16.mxu0 0
        %355 = vmatpush2.bf16.msra.mxu0 0
        %356 = vmatprep.mubr.bf16.mxu0 0
        %357 = vmatmul.mubr.bf16.gmra.mxu0 %v322
        %v358 = vpop.f32.mrf.mxu0
        %v359 = vadd.f32 %v306, %v358
        %v360 = vpop.f32.mrf.mxu0
        %v361 = vpop.f32.mrf.mxu0
        %v362 = vpop.f32.mrf.mxu0
        %363 = vdwg.mxu0
        %v364 = vpack.c.bf16 %v359, %v359
        %vm365 = vcmask 257024
        %366 = vst.msk [vmem:[%s279] sm:$0xf] %vm365, %v364
        %v368 = vunpack.c.l.b16 %v364
        %v369 = vpack.c.b16 %v368, %v368
        %370 = vrot.lane.b32.xlu0 %v369, 96
        %v371 = vpop.permute.xlu0 %370
        %373 = vst.msk [vmem:[%s286] sm:$0xf] %vm365, %v371
        %374 = vrot.lane.b32.xlu0 %v369, 64
        %v375 = vpop.permute.xlu0 %374
        %377 = vst.msk [vmem:[%s293] sm:$0xf] %vm365, %v375
        %s378 = sand.u32 %s119, 1
        %s379 = scalar_lea.sflag [#allocation4], %s378
        %s380 = sand.u32 %s119, 1
        %s381 = smul.addr %s380, 4
        %s382 = scalar_lea.vmem [#allocation7], %s381
        %s383 = sand.u32 %s27, 1
        %s384 = scalar_lea.sflag [#allocation9], %s383
        %s385 = sand.u32 %s147, 1
        %s386 = smul.addr %s385, 4
        %s387 = scalar_lea.vmem [#allocation8], %s386
        %s388 = sand.u32 %s27, 1
        %s389 = scalar_lea.sflag [#allocation9], %s388
        %s390 = sand.u32 %s175, 1
        %s391 = smul.addr %s390, 4
        %s392 = scalar_lea.vmem [#allocation10], %s391
        // Predicated region
        $region41: #{tpu_custom_call.1} parent=31 // pred_check
          %p393 = pneg %p129
        $region42: #{tpu_custom_call.1} parent=31 // pred_check_branch
          %395 = sbr.rel (%p393) target = $region44
        $region43: #{tpu_custom_call.1} parent=31 // pred_region
          %s397 = ssub.s32 64, 64
          %398 = vsyncadd %s379, %s397
          %s399 = sadd.s32 %s32, %s31
          %s400 = smul.addr %s399, 64
          %s401 = scalar_lea.hbm %s3, %s400
          %s403 = sshll.u32 %s382, 4
          %s404 = int_to_ptr.vmem [resolvable:$true] %s403
          %406 = dma.vmem_to_hbm [thread:$0]  %s404, 64, %s401, %s379
        $region44: #{tpu_custom_call.1} parent=31 // pred_fallthru
          _
        // Predicated region
        $region45: #{tpu_custom_call.1} parent=31 // pred_check
          %p407 = pneg %p157
        $region46: #{tpu_custom_call.1} parent=31 // pred_check_branch
          %409 = sbr.rel (%p407) target = $region48
        $region47: #{tpu_custom_call.1} parent=31 // pred_region
          %s411 = ssub.s32 64, 64
          %412 = vsyncadd %s384, %s411
          %s413 = sadd.s32 %s32, %s31
          %s414 = smul.addr %s413, 64
          %s415 = scalar_lea.hbm %s4, %s414
          %s417 = sshll.u32 %s387, 4
          %s418 = int_to_ptr.vmem [resolvable:$true] %s417
          %420 = dma.vmem_to_hbm [thread:$0]  %s418, 64, %s415, %s384
        $region48: #{tpu_custom_call.1} parent=31 // pred_fallthru
          _
        // Predicated region
        $region49: #{tpu_custom_call.1} parent=31 // pred_check
          %p421 = pneg %p185
        $region50: #{tpu_custom_call.1} parent=31 // pred_check_branch
          %423 = sbr.rel (%p421) target = $region52
        $region51: #{tpu_custom_call.1} parent=31 // pred_region
          %s425 = ssub.s32 64, 64
          %426 = vsyncadd %s389, %s425
          %s427 = sadd.s32 %s32, %s31
          %s428 = smul.addr %s427, 64
          %s429 = scalar_lea.hbm %s5, %s428
          %s431 = sshll.u32 %s392, 4
          %s432 = int_to_ptr.vmem [resolvable:$true] %s431
          %434 = dma.vmem_to_hbm [thread:$0]  %s432, 64, %s429, %s389
        $region52: #{tpu_custom_call.1} parent=31 // pred_fallthru
          _
      $region32: #{tpu_custom_call.1} parent=5 // pred_fallthru
        _
      %p435 = scmp.le.s32.totalorder 2, %s22
      // Predicated region
      $region53: #{tpu_custom_call.1} parent=5 // pred_check
        %p436 = pneg %p435
      $region54: #{tpu_custom_call.1} parent=5 // pred_check_branch
        %438 = sbr.rel (%p436) target = $region56
      $region55: #{tpu_custom_call.1} parent=5 // pred_region
        %s439 = ssub.s32 %s22, 2
        // Predicated region
        $region57: #{tpu_custom_call.1} parent=55 // pred_check
          %p440 = pneg %p135
        $region58: #{tpu_custom_call.1} parent=55 // pred_check_branch
          %442 = sbr.rel (%p440) target = $region60
        $region59: #{tpu_custom_call.1} parent=55 // pred_region
          %s443 = sand.u32 %s120, 1
          %s444 = scalar_lea.sflag [#allocation4], %s443
          %s445 = sand.u32 %s120, 1
          %s446 = smul.addr %s445, 4
          %s447 = scalar_lea.vmem [#allocation7], %s446
          %448 = dma.done %s444, 64
        $region60: #{tpu_custom_call.1} parent=55 // pred_fallthru
          _
        // Predicated region
        $region61: #{tpu_custom_call.1} parent=55 // pred_check
          %p449 = pneg %p163
        $region62: #{tpu_custom_call.1} parent=55 // pred_check_branch
          %451 = sbr.rel (%p449) target = $region64
        $region63: #{tpu_custom_call.1} parent=55 // pred_region
          %s452 = sand.u32 %s28, 1
          %s453 = scalar_lea.sflag [#allocation9], %s452
          %s454 = sand.u32 %s148, 1
          %s455 = smul.addr %s454, 4
          %s456 = scalar_lea.vmem [#allocation8], %s455
          %457 = dma.done %s453, 64
        $region64: #{tpu_custom_call.1} parent=55 // pred_fallthru
          _
        // Predicated region
        $region65: #{tpu_custom_call.1} parent=55 // pred_check
          %p458 = pneg %p191
        $region66: #{tpu_custom_call.1} parent=55 // pred_check_branch
          %460 = sbr.rel (%p458) target = $region68
        $region67: #{tpu_custom_call.1} parent=55 // pred_region
          %s461 = sand.u32 %s28, 1
          %s462 = scalar_lea.sflag [#allocation9], %s461
          %s463 = sand.u32 %s176, 1
          %s464 = smul.addr %s463, 4
          %s465 = scalar_lea.vmem [#allocation10], %s464
          %466 = dma.done %s462, 64
        $region68: #{tpu_custom_call.1} parent=55 // pred_fallthru
          _
      $region56: #{tpu_custom_call.1} parent=5 // pred_fallthru
        _
    $region6: #{tpu_custom_call.1} parent=1 // loop_footer
      %s26 = sadd.s32 1, %s22
    $region7: #{tpu_custom_call.1} parent=1 // loop_footer_branch
      %21 = sbr.rel target = $region3
    $region8: #{tpu_custom_call.1} parent=1 // loop_exit
      _
    %467 = vsyncpa [#allocation3], 1
    %s468 = scalar_lea.sflag [#allocation3], 1
    %469 = vsyncpa %s468, 1
    %470 = vsyncpa [#allocation6], 1
    %471 = vsyncpa [#allocation4], 1
    %s472 = scalar_lea.sflag [#allocation4], 1
    %473 = vsyncpa %s472, 1
    %474 = vsyncpa [#allocation9], 1
    %s475 = scalar_lea.sflag [#allocation9], 1
    %476 = vsyncpa %s475, 1

</llo_original>
